<compile_context>
chip_gen: v7x
topology: tpu7x:2x2x1
jax: 0.10.0
libtpu: 0.0.40
codegen_flags: <defaults>
</compile_context>

<pallas_src>
import functools

import jax
import jax.numpy as jnp
from jax.experimental import pallas as pl
from jax.experimental.pallas import tpu as pltpu


def _round_up(x, m):
    return (x + m - 1) // m * m


# ----------------------------------------------------------------------------
# Pallas kernel: fused input projection + Linear/ReLU + Linear/Tanh
# ----------------------------------------------------------------------------
def _policy_kernel(x_ref, w_in_ref, b_in_ref, w1_ref, b1_ref, w2_ref, b2_ref,
                   out_ref):
    cd = w_in_ref.dtype          # MXU operand dtype (bf16 default, or f32)

    # Fused input layer: [a|o|z] @ [Wa;Wo;Wl] + (ba+bo+bl), f32 accumulation.
    h = jnp.dot(x_ref[...], w_in_ref[...],
                preferred_element_type=jnp.float32) + b_in_ref[...]
    h = jnp.maximum(h, 0.0)                                     # ReLU

    h = jnp.dot(h.astype(cd), w1_ref[...],
                preferred_element_type=jnp.float32) + b1_ref[...]
    h = jnp.maximum(h, 0.0)                                     # ReLU

    y = jnp.dot(h.astype(cd), w2_ref[...],
                preferred_element_type=jnp.float32) + b2_ref[...]
    out_ref[...] = jnp.tanh(y).astype(out_ref.dtype)            # Tanh


def _run_policy_kernel(x, params):
    """x: (R, d_a + d_o + d_opp) rows -> (R, d_opp) f32."""
    R, k_in = x.shape
    h_pad = params["w1"].shape[0]
    d_opp = params["w2"].shape[1]

    # Row tile: multiple of 8 sublanes, up to 2048 rows (per-step working set
    # ~4-5 MiB at tm=2048, far under every generation's VMEM).  Keep >= 2 row
    # tiles once there is enough work so v7x's second TensorCore has something
    # to do ("parallel" grid axis).
    rows8 = _round_up(R, 8)
    tm = min(2048, rows8)
    if rows8 >= 1024:
        tm = min(tm, _round_up(pl.cdiv(rows8, 2), 8))
    grid = (pl.cdiv(R, tm),)     # non-dividing final tile handled by Pallas

    def _resident(p):            # weights/biases: same block every grid step
        return pl.BlockSpec(p.shape, lambda i: (0, 0))

    w_bytes = sum(int(p.size) * p.dtype.itemsize for p in params.values())
    cost = pl.CostEstimate(
        flops=int(2 * R * (k_in * h_pad + h_pad * h_pad + h_pad * d_opp)),
        transcendentals=int(R * d_opp),
        bytes_accessed=int(R * k_in * x.dtype.itemsize
                           + R * d_opp * 4 + w_bytes),
    )

    return pl.pallas_call(
        _policy_kernel,
        out_shape=jax.ShapeDtypeStruct((R, d_opp), jnp.float32),
        grid_spec=pltpu.PrefetchScalarGridSpec(
            num_scalar_prefetch=0,
            grid=grid,
            in_specs=[
                pl.BlockSpec((tm, k_in), lambda i: (i, 0)),   # streamed rows
                _resident(params["w_in"]),
                _resident(params["b_in"]),
                _resident(params["w1"]),
                _resident(params["b1"]),
                _resident(params["w2"]),
                _resident(params["b2"]),
            ],
            out_specs=pl.BlockSpec((tm, d_opp), lambda i: (i, 0)),
        ),
        compiler_params=pltpu.CompilerParams(
            dimension_semantics=("parallel",),
            vmem_limit_bytes=16 << 20),
        cost_estimate=cost,
    )(x, params["w_in"], params["b_in"], params["w1"], params["b1"],
      params["w2"], params["b2"])


# ----------------------------------------------------------------------------
# Parameter init (fused, hidden lanes padded, output lanes NOT padded)
# ----------------------------------------------------------------------------
def init_params(key, action_dim, obs_dim, opp_action_dim, hidden=100,
                dtype=jnp.bfloat16):
    """Fused / hidden-padded parameters.

    `dtype` controls the MXU weight operands only (bf16 default: native MXU
    dtype on v5e/v6e/v7x, halves resident VMEM and streamed bytes); biases,
    accumulation and the output stay f32.  Pass dtype=jnp.float32 for
    exact-f32 matmuls.
    """
    h_pad = _round_up(hidden, 128)
    ks = jax.random.split(key, 5)
    scale = 0.1

    def lin(k, fan_in, fan_out):
        kw, kb = jax.random.split(k)
        w = scale * jax.random.normal(kw, (fan_in, fan_out), jnp.float32)
        b = scale * jax.random.normal(kb, (1, fan_out), jnp.float32)
        return w, b

    wa, ba = lin(ks[0], action_dim, hidden)           # action_linear
    wo, bo = lin(ks[1], obs_dim, hidden)              # obs_linear
    wl, bl = lin(ks[2], opp_action_dim, hidden)       # latent_linear
    w1, b1 = lin(ks[3], hidden, hidden)               # linear[0]
    w2, b2 = lin(ks[4], hidden, opp_action_dim)       # linear[2]

    # Fuse the three input projections into one matmul over [a|o|z]; pre-sum
    # the three input biases.  Zero-padding hidden 100 -> 128 is exact through
    # relu / matmul / tanh.  The output dim stays the logical d_opp.
    w_in = jnp.concatenate([wa, wo, wl], axis=0)      # (d_a+d_o+d_opp, hidden)
    b_in = ba + bo + bl                               # (1, hidden)

    def pad_to(x, rows, cols):
        out = jnp.zeros((rows, cols), jnp.float32)
        return out.at[:x.shape[0], :x.shape[1]].set(x)

    params = dict(
        w_in=pad_to(w_in, w_in.shape[0], h_pad),      # (k_in, h_pad)
        b_in=pad_to(b_in, 1, h_pad),                  # (1, h_pad)
        w1=pad_to(w1, h_pad, h_pad),                  # (h_pad, h_pad)
        b1=pad_to(b1, 1, h_pad),                      # (1, h_pad)
        w2=pad_to(w2, h_pad, opp_action_dim),         # (h_pad, d_opp)
        b2=b2,                                        # (1, d_opp)
    )
    if dtype != jnp.float32:
        for name in ("w_in", "w1", "w2"):
            params[name] = params[name].astype(dtype)
    return params


# ----------------------------------------------------------------------------
# Forward wrapper (mirrors the torch forward)
# ----------------------------------------------------------------------------
@functools.partial(jax.jit, static_argnames=("n_action_samples",))
def stochastic_nn_conditional_policy(params, inputs, observations, latent_key,
                                     n_action_samples=1):
    """inputs = (actions, obs_features); `observations` only supplies the batch
    size (n_state_samples), exactly like the torch forward."""
    actions, obs_in = inputs
    n_state_samples = observations.shape[0]
    assert actions.shape[0] == n_state_samples == obs_in.shape[0], (
        "actions / obs / observations batch sizes must agree")
    d_opp = params["w2"].shape[1]
    cd = params["w_in"].dtype
    n_samples = max(n_action_samples, 1)

    # Latent laid out (batch, n_samples, d_opp), matching the torch layout for
    # n_action_samples > 1; keeps output rows already in consumer order.
    latent = jax.random.normal(
        latent_key, (n_state_samples, n_samples, d_opp), jnp.float32)

    # One fused row operand per (state, action-sample): [a | o | z].
    ao = jnp.concatenate([actions.astype(jnp.float32),
                          obs_in.astype(jnp.float32)], axis=-1)
    ao_b = jnp.broadcast_to(ao[:, None, :],
                            (n_state_samples, n_samples, ao.shape[-1]))
    x = jnp.concatenate([ao_b, latent], axis=-1).reshape(
        n_state_samples * n_samples, -1).astype(cd)

    out = _run_policy_kernel(x, params)               # (B*S, d_opp), f32
    out = out.reshape(n_state_samples, n_samples, d_opp)
    if n_action_samples > 1:
        return out                                    # (B, S, d_opp), no transpose
    return out[:, 0, :]                               # (B, d_opp)


if __name__ == "__main__":
    # Small shapes consistent with the module:
    #   batch B=8, action_dim=6, obs_dim=12, opponent_action_dim=4, hidden=100
    B, D_ACT, D_OBS, D_OPP, HIDDEN = 8, 6, 12, 4, 100

    key = jax.random.PRNGKey(0)
    k_params, k_act, k_obs, k_latent = jax.random.split(key, 4)

    actions = jax.random.normal(k_act, (B, D_ACT), jnp.float32)
    obs_feats = jax.random.normal(k_obs, (B, D_OBS), jnp.float32)
    observations = obs_feats   # only .shape[0] is used, as in the torch forward

    # ---- exact-f32 mode: strict numerical check vs pure-JAX reference -----
    params_f32 = init_params(k_params, D_ACT, D_OBS, D_OPP, hidden=HIDDEN,
                             dtype=jnp.float32)
    out = stochastic_nn_conditional_policy(
        params_f32, (actions, obs_feats), observations, k_latent,
        n_action_samples=1)
    out = jax.block_until_ready(out)
    assert out.shape == (B, D_OPP)
    assert bool(jnp.all(jnp.isfinite(out)))
    assert bool(jnp.all(jnp.abs(out) <= 1.0))         # tanh range

    # Pure-JAX reference drawing the SAME latent stream as the wrapper.
    z = jax.random.normal(k_latent, (B, 1, D_OPP), jnp.float32)[:, 0, :]
    x_ref = jnp.concatenate([actions, obs_feats, z], axis=-1)
    h = jnp.maximum(x_ref @ params_f32["w_in"] + params_f32["b_in"], 0.0)
    h = jnp.maximum(h @ params_f32["w1"] + params_f32["b1"], 0.0)
    want = jnp.tanh(h @ params_f32["w2"] + params_f32["b2"])
    assert bool(jnp.allclose(out, want, atol=1e-5, rtol=1e-5))

    # ---- default bf16-operand mode (f32 accumulation / f32 output) --------
    params = init_params(k_params, D_ACT, D_OBS, D_OPP, hidden=HIDDEN)
    out_bf = stochastic_nn_conditional_policy(
        params, (actions, obs_feats), observations, k_latent,
        n_action_samples=1)
    out_bf = jax.block_until_ready(out_bf)
    assert out_bf.shape == (B, D_OPP)
    assert bool(jnp.allclose(out_bf, want, atol=3e-2, rtol=3e-2))

    # Multi-sample path: result comes back directly as (B, n_samples, d_opp),
    # no transpose and no broadcast copies of actions/obs beyond the tiny
    # per-row [a|o] bytes inside the fused operand.
    out_multi = stochastic_nn_conditional_policy(
        params, (actions, obs_feats), observations, k_latent,
        n_action_samples=3)
    out_multi = jax.block_until_ready(out_multi)
    assert out_multi.shape == (B, 3, D_OPP)
    assert bool(jnp.all(jnp.isfinite(out_multi)))
    assert bool(jnp.all(jnp.abs(out_multi) <= 1.0))

    print("KERNEL_OK")
</pallas_src>

<mosaic_0001>
module attributes {stable_mosaic.version = 11 : i64} {
  func.func @_policy_kernel(%arg0: i32, %arg1: memref<8x22xf32, #tpu.memory_space<vmem>>, %arg2: memref<22x128xf32, #tpu.memory_space<vmem>>, %arg3: memref<1x128xf32, #tpu.memory_space<vmem>>, %arg4: memref<128x128xf32, #tpu.memory_space<vmem>>, %arg5: memref<1x128xf32, #tpu.memory_space<vmem>>, %arg6: memref<128x4xf32, #tpu.memory_space<vmem>>, %arg7: memref<1x4xf32, #tpu.memory_space<vmem>>, %arg8: memref<8x4xf32, #tpu.memory_space<vmem>>) attributes {dimension_semantics = [#tpu.dimension_semantics<parallel>], iteration_bounds = array<i64: 1>, scalar_prefetch = 0 : i64, scratch_operands = 0 : i64, tpu.core_type = #tpu.core_type<tc>, window_params = [{transform_indices = @transform_0, window_bounds = array<i64: 8, 22>}, {pipeline_mode = #tpu.pipeline_mode<synchronous>, transform_indices = @transform_1, window_bounds = array<i64: 22, 128>}, {pipeline_mode = #tpu.pipeline_mode<synchronous>, transform_indices = @transform_2, window_bounds = array<i64: 1, 128>}, {pipeline_mode = #tpu.pipeline_mode<synchronous>, transform_indices = @transform_3, window_bounds = array<i64: 128, 128>}, {pipeline_mode = #tpu.pipeline_mode<synchronous>, transform_indices = @transform_4, window_bounds = array<i64: 1, 128>}, {pipeline_mode = #tpu.pipeline_mode<synchronous>, transform_indices = @transform_5, window_bounds = array<i64: 128, 4>}, {pipeline_mode = #tpu.pipeline_mode<synchronous>, transform_indices = @transform_6, window_bounds = array<i64: 1, 4>}, {transform_indices = @transform_7, window_bounds = array<i64: 8, 4>}]} {
    %c0 = arith.constant 0 : index
    %c0_0 = arith.constant 0 : index
    %0 = vector.load %arg1[%c0, %c0_0] : memref<8x22xf32, #tpu.memory_space<vmem>>, vector<8x22xf32>
    %c0_1 = arith.constant 0 : index
    %c0_2 = arith.constant 0 : index
    %1 = vector.load %arg2[%c0_1, %c0_2] : memref<22x128xf32, #tpu.memory_space<vmem>>, vector<22x128xf32>
    %cst = arith.constant dense<0.000000e+00> : vector<8x128xf32>
    %2 = tpu.matmul %0, %1, %cst {dimension_numbers = #tpu.dot_dimension_numbers<[1], [0], [0], [1], [0, 0, 1, 1], [], []>} : vector<8x22xf32>, vector<22x128xf32>, vector<8x128xf32> -> vector<8x128xf32>
    %c0_3 = arith.constant 0 : index
    %c0_4 = arith.constant 0 : index
    %3 = vector.load %arg3[%c0_3, %c0_4] : memref<1x128xf32, #tpu.memory_space<vmem>>, vector<1x128xf32>
    %4 = vector.broadcast %3 : vector<1x128xf32> to vector<8x128xf32>
    %5 = arith.addf %2, %4 : vector<8x128xf32>
    %cst_5 = arith.constant 0.000000e+00 : f32
    %6 = vector.broadcast %cst_5 : f32 to vector<8x128xf32>
    %7 = arith.maximumf %5, %6 : vector<8x128xf32>
    %c0_6 = arith.constant 0 : index
    %c0_7 = arith.constant 0 : index
    %8 = vector.load %arg4[%c0_6, %c0_7] : memref<128x128xf32, #tpu.memory_space<vmem>>, vector<128x128xf32>
    %cst_8 = arith.constant dense<0.000000e+00> : vector<8x128xf32>
    %9 = tpu.matmul %7, %8, %cst_8 {dimension_numbers = #tpu.dot_dimension_numbers<[1], [0], [0], [1], [0, 0, 1, 1], [], []>} : vector<8x128xf32>, vector<128x128xf32>, vector<8x128xf32> -> vector<8x128xf32>
    %c0_9 = arith.constant 0 : index
    %c0_10 = arith.constant 0 : index
    %10 = vector.load %arg5[%c0_9, %c0_10] : memref<1x128xf32, #tpu.memory_space<vmem>>, vector<1x128xf32>
    %11 = vector.broadcast %10 : vector<1x128xf32> to vector<8x128xf32>
    %12 = arith.addf %9, %11 : vector<8x128xf32>
    %cst_11 = arith.constant 0.000000e+00 : f32
    %13 = vector.broadcast %cst_11 : f32 to vector<8x128xf32>
    %14 = arith.maximumf %12, %13 : vector<8x128xf32>
    %c0_12 = arith.constant 0 : index
    %c0_13 = arith.constant 0 : index
    %15 = vector.load %arg6[%c0_12, %c0_13] : memref<128x4xf32, #tpu.memory_space<vmem>>, vector<128x4xf32>
    %cst_14 = arith.constant dense<0.000000e+00> : vector<8x4xf32>
    %16 = tpu.matmul %14, %15, %cst_14 {dimension_numbers = #tpu.dot_dimension_numbers<[1], [0], [0], [1], [0, 0, 1, 1], [], []>} : vector<8x128xf32>, vector<128x4xf32>, vector<8x4xf32> -> vector<8x4xf32>
    %c0_15 = arith.constant 0 : index
    %c0_16 = arith.constant 0 : index
    %17 = vector.load %arg7[%c0_15, %c0_16] : memref<1x4xf32, #tpu.memory_space<vmem>>, vector<1x4xf32>
    %18 = vector.broadcast %17 : vector<1x4xf32> to vector<8x4xf32>
    %19 = arith.addf %16, %18 : vector<8x4xf32>
    %20 = math.tanh %19 : vector<8x4xf32>
    %c0_17 = arith.constant 0 : index
    %c0_18 = arith.constant 0 : index
    %21 = vector.load %arg8[%c0_17, %c0_18] : memref<8x4xf32, #tpu.memory_space<vmem>>, vector<8x4xf32>
    tpu.vector_store %arg8[%c0_17, %c0_18], %20 {strides = array<i32>} : memref<8x4xf32, #tpu.memory_space<vmem>>, vector<8x4xf32>,
    return
  }
  func.func @transform_0(%arg0: i32) -> (i32, i32) {
    %c0_i32 = arith.constant 0 : i32
    %c0_i32_0 = arith.constant 0 : i32
    return %arg0, %c0_i32 : i32, i32
  }
  func.func @transform_1(%arg0: i32) -> (i32, i32) {
    %c0_i32 = arith.constant 0 : i32
    %c0_i32_0 = arith.constant 0 : i32
    %c0_i32_1 = arith.constant 0 : i32
    return %c0_i32, %c0_i32_0 : i32, i32
  }
  func.func @transform_2(%arg0: i32) -> (i32, i32) {
    %c0_i32 = arith.constant 0 : i32
    %c0_i32_0 = arith.constant 0 : i32
    %c0_i32_1 = arith.constant 0 : i32
    return %c0_i32, %c0_i32_0 : i32, i32
  }
  func.func @transform_3(%arg0: i32) -> (i32, i32) {
    %c0_i32 = arith.constant 0 : i32
    %c0_i32_0 = arith.constant 0 : i32
    %c0_i32_1 = arith.constant 0 : i32
    return %c0_i32, %c0_i32_0 : i32, i32
  }
  func.func @transform_4(%arg0: i32) -> (i32, i32) {
    %c0_i32 = arith.constant 0 : i32
    %c0_i32_0 = arith.constant 0 : i32
    %c0_i32_1 = arith.constant 0 : i32
    return %c0_i32, %c0_i32_0 : i32, i32
  }
  func.func @transform_5(%arg0: i32) -> (i32, i32) {
    %c0_i32 = arith.constant 0 : i32
    %c0_i32_0 = arith.constant 0 : i32
    %c0_i32_1 = arith.constant 0 : i32
    return %c0_i32, %c0_i32_0 : i32, i32
  }
  func.func @transform_6(%arg0: i32) -> (i32, i32) {
    %c0_i32 = arith.constant 0 : i32
    %c0_i32_0 = arith.constant 0 : i32
    %c0_i32_1 = arith.constant 0 : i32
    return %c0_i32, %c0_i32_0 : i32, i32
  }
  func.func @transform_7(%arg0: i32) -> (i32, i32) {
    %c0_i32 = arith.constant 0 : i32
    %c0_i32_0 = arith.constant 0 : i32
    return %arg0, %c0_i32 : i32, i32
  }
}

</mosaic_0001>

<llo_original>
// kernel: stochastic_nn_conditional_policy.1
$region0: #{stochastic_nn_conditional_policy.1}
  #allocation0 [shape = 'u32[]', space=smem, size = 0x4, offset = 0x4, fixed_abs, tag = 'smem constant byte address 0x4 - core index']
  #allocation1 [shape = 'u32[144,128]{1,0:T(1,128)}', space=vmem, size = 0x12000, scoped, tag = 'internal scratch']
  %s0 = inlined_call_operand.vmem [shape: f32[8,22], index: 0, kind: input, shape index: {}]
  %s1 = inlined_call_operand.vmem [shape: f32[22,128], index: 1, kind: input, shape index: {}]
  %s2 = inlined_call_operand.vmem [shape: f32[1,128], index: 2, kind: input, shape index: {}]
  %s3 = inlined_call_operand.vmem [shape: f32[128,128], index: 3, kind: input, shape index: {}]
  %s4 = inlined_call_operand.vmem [shape: f32[1,128], index: 4, kind: input, shape index: {}]
  %s5 = inlined_call_operand.vmem [shape: f32[128,4], index: 5, kind: input, shape index: {}]
  %s6 = inlined_call_operand.vmem [shape: f32[1,4], index: 6, kind: input, shape index: {}]
  %s7 = inlined_call_operand.vmem [shape: f32[8,4], index: 7, kind: output, shape index: {}]
  %s8 = sld [smem:[#allocation0]]
  $region38: #{stochastic_nn_conditional_policy.1} parent=0
    _
  %s10 = ssub.s32 1, %s8
  %s11 = scalar_select 0, %s10, %s8
  // Predicated region
  $region2: #{stochastic_nn_conditional_policy.1} parent=0 // pred_check
    _
  $region3: #{stochastic_nn_conditional_policy.1} parent=0 // pred_check_branch
    %13 = sbr.rel (0) target = $region5
  $region4: #{stochastic_nn_conditional_policy.1} parent=0 // pred_region
    _
  $region5: #{stochastic_nn_conditional_policy.1} parent=0 // pred_fallthru
    _
  // Predicated region
  $region6: #{stochastic_nn_conditional_policy.1} parent=0 // pred_check
    _
  $region7: #{stochastic_nn_conditional_policy.1} parent=0 // pred_check_branch
    %15 = sbr.rel (0) target = $region9
  $region8: #{stochastic_nn_conditional_policy.1} parent=0 // pred_region
    _
  $region9: #{stochastic_nn_conditional_policy.1} parent=0 // pred_fallthru
    _
  // Predicated region
  $region10: #{stochastic_nn_conditional_policy.1} parent=0 // pred_check
    _
  $region11: #{stochastic_nn_conditional_policy.1} parent=0 // pred_check_branch
    %17 = sbr.rel (0) target = $region13
  $region12: #{stochastic_nn_conditional_policy.1} parent=0 // pred_region
    _
  $region13: #{stochastic_nn_conditional_policy.1} parent=0 // pred_fallthru
    _
  // Predicated region
  $region14: #{stochastic_nn_conditional_policy.1} parent=0 // pred_check
    _
  $region15: #{stochastic_nn_conditional_policy.1} parent=0 // pred_check_branch
    %19 = sbr.rel (0) target = $region17
  $region16: #{stochastic_nn_conditional_policy.1} parent=0 // pred_region
    _
  $region17: #{stochastic_nn_conditional_policy.1} parent=0 // pred_fallthru
    _
  // Predicated region
  $region18: #{stochastic_nn_conditional_policy.1} parent=0 // pred_check
    _
  $region19: #{stochastic_nn_conditional_policy.1} parent=0 // pred_check_branch
    %21 = sbr.rel (0) target = $region21
  $region20: #{stochastic_nn_conditional_policy.1} parent=0 // pred_region
    _
  $region21: #{stochastic_nn_conditional_policy.1} parent=0 // pred_fallthru
    _
  // Predicated region
  $region22: #{stochastic_nn_conditional_policy.1} parent=0 // pred_check
    _
  $region23: #{stochastic_nn_conditional_policy.1} parent=0 // pred_check_branch
    %23 = sbr.rel (0) target = $region25
  $region24: #{stochastic_nn_conditional_policy.1} parent=0 // pred_region
    _
  $region25: #{stochastic_nn_conditional_policy.1} parent=0 // pred_fallthru
    _
  // Predicated region
  $region26: #{stochastic_nn_conditional_policy.1} parent=0 // pred_check
    _
  $region27: #{stochastic_nn_conditional_policy.1} parent=0 // pred_check_branch
    %25 = sbr.rel (0) target = $region29
  $region28: #{stochastic_nn_conditional_policy.1} parent=0 // pred_region
    _
  $region29: #{stochastic_nn_conditional_policy.1} parent=0 // pred_fallthru
    _
  %v26 = vld [vmem:[%s0] sm:$0xff]
  %v27 = vld [vmem:[%s1] sm:$0xff]
  %v28 = vld [vmem:[%s1 + $0x8] sm:$0xff]
  %v29 = vld [vmem:[%s1 + $0x10] sm:$0x3f]
  %v30 = vld [vmem:[%s2] sm:$0x1]
  %v32 = vlaneseq
  %v33 = vshrl.u32 %v32, 7
  %v34 = vsub.s32 0, %v33
  %v35 = vrot.slane %v30, %v34
  %vm37 = vcmask 179200
  %v39 = vsel %vm37, %v26, 0
  %vm41 = vcmask 1045504
  %v43 = vsel %vm41, %v29, 0
  %45 = vmatprep.subr.mxu0 0.0
  %46 = vmatpush1.msra.mxu0 %v27
  %47 = vmatprep.subr.mxu0 0.0
  %48 = vmatpush1.msra.mxu0 %v28
  %49 = vmatprep.subr.mxu0 0.0
  %50 = vmatpush1.msra.mxu0 %v43
  %51 = vmatprep.subr.mxu0 0.0
  %52 = vmatpush1.msra.mxu0 0.0
  %53 = vmatprep.subr.mxu0 0.0
  %54 = vmatpush1.msra.mxu0 0.0
  %55 = vmatprep.subr.mxu0 0.0
  %56 = vmatpush1.msra.mxu0 0.0
  %57 = vmatprep.subr.mxu0 0.0
  %58 = vmatpush1.msra.mxu0 0.0
  %59 = vmatprep.subr.mxu0 0.0
  %60 = vmatpush1.msra.mxu0 0.0
  %61 = vmatprep.subr.mxu0 0.0
  %62 = vmatpush1.msra.mxu0 0.0
  %63 = vmatprep.subr.mxu0 0.0
  %64 = vmatpush1.msra.mxu0 0.0
  %65 = vmatprep.subr.mxu0 0.0
  %66 = vmatpush1.msra.mxu0 0.0
  %67 = vmatprep.subr.mxu0 0.0
  %68 = vmatpush1.msra.mxu0 0.0
  %69 = vmatprep.subr.mxu0 0.0
  %70 = vmatpush1.msra.mxu0 0.0
  %71 = vmatprep.subr.mxu0 0.0
  %72 = vmatpush1.msra.mxu0 0.0
  %73 = vmatprep.subr.mxu0 0.0
  %74 = vmatpush1.msra.mxu0 0.0
  %75 = vmatprep.subr.mxu0 0.0
  %76 = vmatpush1.msra.mxu0 0.0
  %77 = vmatprep.subr.mxu0 0.0
  %78 = vmatpush1.msra.mxu0 0.0
  %79 = vmatprep.subr.mxu0 0.0
  %80 = vmatpush1.msra.mxu0 0.0
  %81 = vmatprep.subr.mxu0 0.0
  %82 = vmatpush1.msra.mxu0 0.0
  %83 = vmatprep.subr.mxu0 0.0
  %84 = vmatpush1.msra.mxu0 0.0
  %85 = vmatprep.subr.mxu0 0.0
  %86 = vmatpush1.msra.mxu0 0.0
  %87 = vmatprep.subr.mxu0 0.0
  %88 = vmatpush1.msra.mxu0 0.0
  %89 = vmatprep.subr.mxu0 0.0
  %90 = vmatpush1.msra.mxu0 0.0
  %91 = vmatprep.subr.mxu0 0.0
  %92 = vmatpush1.msra.mxu0 0.0
  %93 = vmatprep.subr.mxu0 0.0
  %94 = vmatpush1.msra.mxu0 0.0
  %95 = vmatprep.subr.mxu0 0.0
  %96 = vmatpush1.msra.mxu0 0.0
  %97 = vmatprep.subr.mxu0 0.0
  %98 = vmatpush1.msra.mxu0 0.0
  %99 = vmatprep.subr.mxu0 0.0
  %100 = vmatpush1.msra.mxu0 0.0
  %101 = vmatprep.subr.mxu0 0.0
  %102 = vmatpush1.msra.mxu0 0.0
  %103 = vmatprep.subr.mxu0 0.0
  %104 = vmatpush1.msra.mxu0 0.0
  %105 = vmatprep.subr.mxu0 0.0
  %106 = vmatpush1.msra.mxu0 0.0
  %107 = vmatprep.subr.mxu0 0.0
  %108 = vmatpush1.msra.mxu0 0.0
  %109 = vmatprep.mubr.f32.mxu0 0.0
  %110 = vmatmul.mubr.f32.gmra.mrb[0].mxu0 %v39
  %v111 = vpop.f32.mrb[0].mxu0
  %v112 = vadd.f32 %v35, %v111
  %v113 = vpop.f32.mrb[0].mxu0
  %114 = vdwg.mxu0
  %v115 = vmax.f32 %v112, 0.0
  %v116 = vld [vmem:[%s3] sm:$0xff]
  %v117 = vld [vmem:[%s3 + $0x8] sm:$0xff]
  %v118 = vld [vmem:[%s3 + $0x10] sm:$0xff]
  %v119 = vld [vmem:[%s3 + $0x18] sm:$0xff]
  %v120 = vld [vmem:[%s3 + $0x20] sm:$0xff]
  %v121 = vld [vmem:[%s3 + $0x28] sm:$0xff]
  %v122 = vld [vmem:[%s3 + $0x30] sm:$0xff]
  %v123 = vld [vmem:[%s3 + $0x38] sm:$0xff]
  %v124 = vld [vmem:[%s3 + $0x40] sm:$0xff]
  %v125 = vld [vmem:[%s3 + $0x48] sm:$0xff]
  %v126 = vld [vmem:[%s3 + $0x50] sm:$0xff]
  %v127 = vld [vmem:[%s3 + $0x58] sm:$0xff]
  %v128 = vld [vmem:[%s3 + $0x60] sm:$0xff]
  %v129 = vld [vmem:[%s3 + $0x68] sm:$0xff]
  %v130 = vld [vmem:[%s3 + $0x70] sm:$0xff]
  %v131 = vld [vmem:[%s3 + $0x78] sm:$0xff]
  %v132 = vld [vmem:[%s4] sm:$0x1]
  %v134 = vlaneseq
  %v135 = vshrl.u32 %v134, 7
  %v136 = vsub.s32 0, %v135
  %v137 = vrot.slane %v132, %v136
  %139 = vmatprep.subr.mxu0 0.0
  %140 = vmatpush1.msra.mxu0 %v116
  %141 = vmatprep.subr.mxu0 0.0
  %142 = vmatpush1.msra.mxu0 %v117
  %143 = vmatprep.subr.mxu0 0.0
  %144 = vmatpush1.msra.mxu0 %v118
  %145 = vmatprep.subr.mxu0 0.0
  %146 = vmatpush1.msra.mxu0 %v119
  %147 = vmatprep.subr.mxu0 0.0
  %148 = vmatpush1.msra.mxu0 %v120
  %149 = vmatprep.subr.mxu0 0.0
  %150 = vmatpush1.msra.mxu0 %v121
  %151 = vmatprep.subr.mxu0 0.0
  %152 = vmatpush1.msra.mxu0 %v122
  %153 = vmatprep.subr.mxu0 0.0
  %154 = vmatpush1.msra.mxu0 %v123
  %155 = vmatprep.subr.mxu0 0.0
  %156 = vmatpush1.msra.mxu0 %v124
  %157 = vmatprep.subr.mxu0 0.0
  %158 = vmatpush1.msra.mxu0 %v125
  %159 = vmatprep.subr.mxu0 0.0
  %160 = vmatpush1.msra.mxu0 %v126
  %161 = vmatprep.subr.mxu0 0.0
  %162 = vmatpush1.msra.mxu0 %v127
  %163 = vmatprep.subr.mxu0 0.0
  %164 = vmatpush1.msra.mxu0 %v128
  %165 = vmatprep.subr.mxu0 0.0
  %166 = vmatpush1.msra.mxu0 %v129
  %167 = vmatprep.subr.mxu0 0.0
  %168 = vmatpush1.msra.mxu0 %v130
  %169 = vmatprep.subr.mxu0 0.0
  %170 = vmatpush1.msra.mxu0 %v131
  %171 = vmatprep.subr.mxu0 0.0
  %172 = vmatpush1.msra.mxu0 0.0
  %173 = vmatprep.subr.mxu0 0.0
  %174 = vmatpush1.msra.mxu0 0.0
  %175 = vmatprep.subr.mxu0 0.0
  %176 = vmatpush1.msra.mxu0 0.0
  %177 = vmatprep.subr.mxu0 0.0
  %178 = vmatpush1.msra.mxu0 0.0
  %179 = vmatprep.subr.mxu0 0.0
  %180 = vmatpush1.msra.mxu0 0.0
  %181 = vmatprep.subr.mxu0 0.0
  %182 = vmatpush1.msra.mxu0 0.0
  %183 = vmatprep.subr.mxu0 0.0
  %184 = vmatpush1.msra.mxu0 0.0
  %185 = vmatprep.subr.mxu0 0.0
  %186 = vmatpush1.msra.mxu0 0.0
  %187 = vmatprep.subr.mxu0 0.0
  %188 = vmatpush1.msra.mxu0 0.0
  %189 = vmatprep.subr.mxu0 0.0
  %190 = vmatpush1.msra.mxu0 0.0
  %191 = vmatprep.subr.mxu0 0.0
  %192 = vmatpush1.msra.mxu0 0.0
  %193 = vmatprep.subr.mxu0 0.0
  %194 = vmatpush1.msra.mxu0 0.0
  %195 = vmatprep.subr.mxu0 0.0
  %196 = vmatpush1.msra.mxu0 0.0
  %197 = vmatprep.subr.mxu0 0.0
  %198 = vmatpush1.msra.mxu0 0.0
  %199 = vmatprep.subr.mxu0 0.0
  %200 = vmatpush1.msra.mxu0 0.0
  %201 = vmatprep.subr.mxu0 0.0
  %202 = vmatpush1.msra.mxu0 0.0
  %203 = vmatprep.mubr.f32.mxu0 0.0
  %204 = vmatmul.mubr.f32.gmra.mrb[0].mxu0 %v115
  %v205 = vpop.f32.mrb[0].mxu0
  %v206 = vadd.f32 %v137, %v205
  %v207 = vpop.f32.mrb[0].mxu0
  %208 = vdwg.mxu0
  %v209 = vmax.f32 %v206, 0.0
  %v210 = vld [vmem:[%s5] sm:$0xff]
  %v211 = vld [vmem:[%s5 + $0x8] sm:$0xff]
  %v212 = vld [vmem:[%s5 + $0x10] sm:$0xff]
  %v213 = vld [vmem:[%s5 + $0x18] sm:$0xff]
  %v214 = vld [vmem:[%s5 + $0x20] sm:$0xff]
  %v215 = vld [vmem:[%s5 + $0x28] sm:$0xff]
  %v216 = vld [vmem:[%s5 + $0x30] sm:$0xff]
  %v217 = vld [vmem:[%s5 + $0x38] sm:$0xff]
  %v218 = vld [vmem:[%s5 + $0x40] sm:$0xff]
  %v219 = vld [vmem:[%s5 + $0x48] sm:$0xff]
  %v220 = vld [vmem:[%s5 + $0x50] sm:$0xff]
  %v221 = vld [vmem:[%s5 + $0x58] sm:$0xff]
  %v222 = vld [vmem:[%s5 + $0x60] sm:$0xff]
  %v223 = vld [vmem:[%s5 + $0x68] sm:$0xff]
  %v224 = vld [vmem:[%s5 + $0x70] sm:$0xff]
  %v225 = vld [vmem:[%s5 + $0x78] sm:$0xff]
  %v226 = vld [vmem:[%s6] sm:$0x1]
  %v228 = vlaneseq
  %v229 = vshrl.u32 %v228, 7
  %v230 = vsub.s32 0, %v229
  %v231 = vrot.slane %v226, %v230
  %233 = vmatprep.subr.mxu0 0.0
  %234 = vmatpush1.msra.mxu0 %v210
  %235 = vmatprep.subr.mxu0 0.0
  %236 = vmatpush1.msra.mxu0 %v211
  %237 = vmatprep.subr.mxu0 0.0
  %238 = vmatpush1.msra.mxu0 %v212
  %239 = vmatprep.subr.mxu0 0.0
  %240 = vmatpush1.msra.mxu0 %v213
  %241 = vmatprep.subr.mxu0 0.0
  %242 = vmatpush1.msra.mxu0 %v214
  %243 = vmatprep.subr.mxu0 0.0
  %244 = vmatpush1.msra.mxu0 %v215
  %245 = vmatprep.subr.mxu0 0.0
  %246 = vmatpush1.msra.mxu0 %v216
  %247 = vmatprep.subr.mxu0 0.0
  %248 = vmatpush1.msra.mxu0 %v217
  %249 = vmatprep.subr.mxu0 0.0
  %250 = vmatpush1.msra.mxu0 %v218
  %251 = vmatprep.subr.mxu0 0.0
  %252 = vmatpush1.msra.mxu0 %v219
  %253 = vmatprep.subr.mxu0 0.0
  %254 = vmatpush1.msra.mxu0 %v220
  %255 = vmatprep.subr.mxu0 0.0
  %256 = vmatpush1.msra.mxu0 %v221
  %257 = vmatprep.subr.mxu0 0.0
  %258 = vmatpush1.msra.mxu0 %v222
  %259 = vmatprep.subr.mxu0 0.0
  %260 = vmatpush1.msra.mxu0 %v223
  %261 = vmatprep.subr.mxu0 0.0
  %262 = vmatpush1.msra.mxu0 %v224
  %263 = vmatprep.subr.mxu0 0.0
  %264 = vmatpush1.msra.mxu0 %v225
  %265 = vmatprep.subr.mxu0 0.0
  %266 = vmatpush1.msra.mxu0 0.0
  %267 = vmatprep.subr.mxu0 0.0
  %268 = vmatpush1.msra.mxu0 0.0
  %269 = vmatprep.subr.mxu0 0.0
  %270 = vmatpush1.msra.mxu0 0.0
  %271 = vmatprep.subr.mxu0 0.0
  %272 = vmatpush1.msra.mxu0 0.0
  %273 = vmatprep.subr.mxu0 0.0
  %274 = vmatpush1.msra.mxu0 0.0
  %275 = vmatprep.subr.mxu0 0.0
  %276 = vmatpush1.msra.mxu0 0.0
  %277 = vmatprep.subr.mxu0 0.0
  %278 = vmatpush1.msra.mxu0 0.0
  %279 = vmatprep.subr.mxu0 0.0
  %280 = vmatpush1.msra.mxu0 0.0
  %281 = vmatprep.subr.mxu0 0.0
  %282 = vmatpush1.msra.mxu0 0.0
  %283 = vmatprep.subr.mxu0 0.0
  %284 = vmatpush1.msra.mxu0 0.0
  %285 = vmatprep.subr.mxu0 0.0
  %286 = vmatpush1.msra.mxu0 0.0
  %287 = vmatprep.subr.mxu0 0.0
  %288 = vmatpush1.msra.mxu0 0.0
  %289 = vmatprep.subr.mxu0 0.0
  %290 = vmatpush1.msra.mxu0 0.0
  %291 = vmatprep.subr.mxu0 0.0
  %292 = vmatpush1.msra.mxu0 0.0
  %293 = vmatprep.subr.mxu0 0.0
  %294 = vmatpush1.msra.mxu0 0.0
  %295 = vmatprep.subr.mxu0 0.0
  %296 = vmatpush1.msra.mxu0 0.0
  %297 = vmatprep.mubr.f32.mxu0 0.0
  %298 = vmatmul.mubr.f32.gmra.mrb[0].mxu0 %v209
  %v299 = vpop.f32.mrb[0].mxu0
  %v300 = vadd.f32 %v231, %v299
  %v301 = vpop.f32.mrb[0].mxu0
  %302 = vdwg.mxu0
  %v303 = vtanh.pop %v300
  %vm304 = vcmask 31744
  %305 = vst.msk [vmem:[%s7] sm:$0xff] %vm304, %v303
  // Predicated region
  $region30: #{stochastic_nn_conditional_policy.1} parent=0 // pred_check
    _
  $region31: #{stochastic_nn_conditional_policy.1} parent=0 // pred_check_branch
    %307 = sbr.rel (0) target = $region33
  $region32: #{stochastic_nn_conditional_policy.1} parent=0 // pred_region
    _
  $region33: #{stochastic_nn_conditional_policy.1} parent=0 // pred_fallthru
    _
  // Predicated region
  $region34: #{stochastic_nn_conditional_policy.1} parent=0 // pred_check
    _
  $region35: #{stochastic_nn_conditional_policy.1} parent=0 // pred_check_branch
    %309 = sbr.rel (0) target = $region37
  $region36: #{stochastic_nn_conditional_policy.1} parent=0 // pred_region
    _
  $region37: #{stochastic_nn_conditional_policy.1} parent=0 // pred_fallthru
    _

</llo_original>
